<compile_context>
chip_gen: v5e
topology: v5e:2x2
jax: 0.10.0
libtpu: 0.0.40
codegen_flags: <defaults>
</compile_context>

<pallas_src>
import functools

import jax
import jax.numpy as jnp
import numpy as np
from jax import lax
from jax.experimental import pallas as pl
from jax.experimental.pallas import tpu as pltpu

# f32 inputs + HIGHEST precision keep the kernel-vs-reference check tight.
# For v6e/v7x production, cast activations/weights to bf16 and drop this.
_PRECISION = lax.Precision.HIGHEST
_KNN = 16  # denseconv default k


def _pick_tile(N, per_row_bytes, budget_bytes):
    """Whole N if it fits the budget, else the largest divisor of N that is a
    multiple of 8 and fits (falls back to N)."""
    if N * per_row_bytes <= budget_bytes:
        return N
    best = None
    for cand in range(8, N, 8):
        if N % cand == 0 and cand * per_row_bytes <= budget_bytes:
            best = cand
    return best if best is not None else N


# --------------------------- pointwise (1x1) conv ----------------------------

def _pointwise_kernel(x_ref, w_ref, b_ref, o_ref, *, relu):
    # x_ref: (1, Nt, Cin), w_ref: (Cin, Cout), b_ref: (1, Cout)
    h = jnp.dot(x_ref[0], w_ref[...], precision=_PRECISION,
                preferred_element_type=jnp.float32) + b_ref[...]
    if relu:
        h = jnp.maximum(h, 0.0)
    o_ref[0] = h.astype(o_ref.dtype)


def pointwise_conv(x_bnc, w, b, *, relu):
    """Conv1d(kernel_size=1): x (B, N, Cin) @ w (Cin, Cout) + b, optional ReLU."""
    B, N, Cin = x_bnc.shape
    Cout = w.shape[1]
    nt = _pick_tile(N, 4 * 2 * (Cin + Cout), 4 << 20)
    flops = int(2 * B * N * Cin * Cout)
    bytes_acc = int(4 * (x_bnc.size + w.size + b.size + B * N * Cout))
    return pl.pallas_call(
        functools.partial(_pointwise_kernel, relu=relu),
        out_shape=jax.ShapeDtypeStruct((B, N, Cout), jnp.float32),
        grid=(B, N // nt),
        in_specs=[
            pl.BlockSpec((1, nt, Cin), lambda bi, ni: (bi, ni, 0)),
            pl.BlockSpec((Cin, Cout), lambda bi, ni: (0, 0)),
            pl.BlockSpec((1, Cout), lambda bi, ni: (0, 0)),
        ],
        out_specs=pl.BlockSpec((1, nt, Cout), lambda bi, ni: (bi, ni, 0)),
        compiler_params=pltpu.CompilerParams(
            dimension_semantics=("parallel", "parallel"),
            vmem_limit_bytes=32 * 1024 * 1024),
        cost_estimate=pl.CostEstimate(flops=flops, transcendentals=0,
                                      bytes_accessed=bytes_acc),
    )(x_bnc, w, b)


# ------------------------------- fused head tail ------------------------------

def _head_kernel(x_ref, w1_ref, b1_ref, w2_ref, b2_ref, o_ref):
    # relu(x @ w1 + b1) @ w2 + b2 — the 128->64->3 tail, one HBM pass.
    h = jnp.maximum(jnp.dot(x_ref[0], w1_ref[...], precision=_PRECISION,
                            preferred_element_type=jnp.float32) + b1_ref[...], 0.0)
    o = jnp.dot(h, w2_ref[...], precision=_PRECISION,
                preferred_element_type=jnp.float32) + b2_ref[...]
    o_ref[0] = o.astype(o_ref.dtype)


def head_tail(x_bnc, w1, b1, w2, b2):
    B, N, Cin = x_bnc.shape
    Ch, Cout = w1.shape[1], w2.shape[1]
    nt = _pick_tile(N, 4 * (2 * Cin + 2 * Cout + Ch), 4 << 20)
    flops = int(2 * B * N * (Cin * Ch + Ch * Cout))
    bytes_acc = int(4 * (x_bnc.size + w1.size + b1.size + w2.size + b2.size
                         + B * N * Cout))
    return pl.pallas_call(
        _head_kernel,
        out_shape=jax.ShapeDtypeStruct((B, N, Cout), jnp.float32),
        grid=(B, N // nt),
        in_specs=[
            pl.BlockSpec((1, nt, Cin), lambda bi, ni: (bi, ni, 0)),
            pl.BlockSpec((Cin, Ch), lambda bi, ni: (0, 0)),
            pl.BlockSpec((1, Ch), lambda bi, ni: (0, 0)),
            pl.BlockSpec((Ch, Cout), lambda bi, ni: (0, 0)),
            pl.BlockSpec((1, Cout), lambda bi, ni: (0, 0)),
        ],
        out_specs=pl.BlockSpec((1, nt, Cout), lambda bi, ni: (bi, ni, 0)),
        compiler_params=pltpu.CompilerParams(
            dimension_semantics=("parallel", "parallel"),
            vmem_limit_bytes=32 * 1024 * 1024),
        cost_estimate=pl.CostEstimate(flops=flops, transcendentals=0,
                                      bytes_accessed=bytes_acc),
    )(x_bnc, w1, b1, w2, b2)


# --------------------------- fused denseconv kernel ---------------------------

def _denseconv_kernel(knn_ref, ctr_ref, res_ref,
                      w1d_ref, w1c_ref, b1_ref,
                      w2h1_ref, w2d_ref, w2c_ref, b2_ref,
                      w3h2_ref, w3h1_ref, w3d_ref, w3c_ref, b3_ref,
                      wn_ref, bn_ref, *out_refs, emit_cat):
    # knn_ref: (1, K, Nt, C) gathered neighbor features
    # ctr_ref: (1, Nt, C)    per-point (center) features == denseconv input
    # res_ref: (1, Nt, Cres) residual features concatenated after the block
    K, Nt, C = knn_ref.shape[1], knn_ref.shape[2], knn_ref.shape[3]
    G = w1d_ref.shape[1]

    ctr = ctr_ref[0]                              # (Nt, C)
    d = knn_ref[0] - ctr[None]                    # (K, Nt, C) neighbor - center
    df = d.reshape(K * Nt, C)

    def mm(a, w_ref_):
        return jnp.dot(a, w_ref_[...], precision=_PRECISION,
                       preferred_element_type=jnp.float32)

    # Edge feature y = [center, neighbor - center]; the center half of every
    # conv weight is applied once per point (not per neighbor) and broadcast
    # over K.  Lane-axis concats are removed by trace-time weight splits:
    #   conv1(y)            = ctr@w1c + d@w1d
    #   conv2([h1, y])      = h1@w2h1 + ctr@w2c + d@w2d
    #   conv3([h2, h1, y])  = h2@w3h2 + h1@w3h1 + ctr@w3c + d@w3d
    c1 = mm(ctr, w1c_ref) + b1_ref[...]           # (Nt, G)
    c2 = mm(ctr, w2c_ref) + b2_ref[...]
    c3 = mm(ctr, w3c_ref) + b3_ref[...]

    h1 = jnp.maximum(mm(df, w1d_ref).reshape(K, Nt, G) + c1[None], 0.0)
    h1f = h1.reshape(K * Nt, G)
    h2 = jnp.maximum((mm(h1f, w2h1_ref) + mm(df, w2d_ref)).reshape(K, Nt, G)
                     + c2[None], 0.0)
    h2f = h2.reshape(K * Nt, G)
    h3 = ((mm(h2f, w3h2_ref) + mm(h1f, w3h1_ref) + mm(df, w3d_ref))
          .reshape(K, Nt, G) + c3[None])

    # max over the K (neighbor) axis == torch.max(inter_result, dim=2)[0].
    # Channel order matches torch.cat: [conv3, conv2, conv1, y]; max over K of
    # the constant center columns is the center itself.
    h1m = jnp.max(h1, axis=0)
    h2m = jnp.max(h2, axis=0)
    h3m = jnp.max(h3, axis=0)
    dm = jnp.max(d, axis=0)                       # (Nt, C)

    cat = jnp.concatenate([h3m, h2m, h1m, ctr, dm, res_ref[0]], axis=-1)

    # Fused 1x1 "compression" conv (fe.conv2/3/4 or the head conv0) — all have
    # a ReLU in the reference module.
    nxt = jnp.maximum(mm(cat, wn_ref) + bn_ref[...], 0.0)

    if emit_cat:
        cat_ref, nxt_ref = out_refs
        cat_ref[0] = cat.astype(cat_ref.dtype)
    else:
        (nxt_ref,) = out_refs
    nxt_ref[0] = nxt.astype(nxt_ref.dtype)


def denseconv_fused(knn_bknc, ctr_bnc, res_bnc, dc_params, wn, bn, *, emit_cat):
    """Fused denseconv + residual concat + following 1x1 conv.

    knn_bknc: (B, K, N, C) gathered neighbor features
    ctr_bnc : (B, N, C)    denseconv input (= kNN centers)
    res_bnc : (B, N, Cres) residual concatenated after the dense block
    Returns (l_i (B,N,3G+2C+Cres), nxt (B,N,Cnext)) if emit_cat else (nxt,).
    """
    w1, b1, w2, b2, w3, b3 = dc_params
    B, K, N, C = knn_bknc.shape
    assert ctr_bnc.shape == (B, N, C)
    G = w1.shape[1]
    Cres = res_bnc.shape[-1]
    Ccat = 3 * G + 2 * C + Cres
    Cnext = wn.shape[1]
    assert wn.shape[0] == Ccat, (wn.shape, Ccat)

    # Trace-time weight splits (see kernel comment).
    w1c, w1d = w1[:C], w1[C:]
    w2h1, w2c, w2d = w2[:G], w2[G:G + C], w2[G + C:]
    w3h2, w3h1, w3c, w3d = w3[:G], w3[G:2 * G], w3[2 * G:2 * G + C], w3[2 * G + C:]

    weight_bytes = 2 * 4 * (w1.size + w2.size + w3.size + b1.size + b2.size
                            + b3.size + wn.size + bn.size)
    per_row = 4 * (2 * K * C + 2 * C + 2 * Cres           # double-buffered inputs
                   + 2 * Ccat + 2 * Cnext                  # double-buffered outputs
                   + K * C + 3 * K * G + Ccat)             # in-kernel values
    nt = _pick_tile(N, per_row, (10 << 20) - weight_bytes)

    flops = int(2 * B * N * (K * C * G + C * G
                             + K * (G + C) * G + C * G
                             + K * (2 * G + C) * G + C * G
                             + Ccat * Cnext))
    bytes_acc = int(4 * (knn_bknc.size + ctr_bnc.size + res_bnc.size
                         + (B * N * Ccat if emit_cat else 0) + B * N * Cnext)
                    + weight_bytes // 2)

    out_shape = []
    out_specs = []
    if emit_cat:
        out_shape.append(jax.ShapeDtypeStruct((B, N, Ccat), jnp.float32))
        out_specs.append(pl.BlockSpec((1, nt, Ccat), lambda bi, ni: (bi, ni, 0)))
    out_shape.append(jax.ShapeDtypeStruct((B, N, Cnext), jnp.float32))
    out_specs.append(pl.BlockSpec((1, nt, Cnext), lambda bi, ni: (bi, ni, 0)))

    outs = pl.pallas_call(
        functools.partial(_denseconv_kernel, emit_cat=emit_cat),
        out_shape=tuple(out_shape),
        grid=(B, N // nt),
        in_specs=[
            pl.BlockSpec((1, K, nt, C), lambda bi, ni: (bi, 0, ni, 0)),
            pl.BlockSpec((1, nt, C), lambda bi, ni: (bi, ni, 0)),
            pl.BlockSpec((1, nt, Cres), lambda bi, ni: (bi, ni, 0)),
            pl.BlockSpec((C, G), lambda bi, ni: (0, 0)),       # w1d
            pl.BlockSpec((C, G), lambda bi, ni: (0, 0)),       # w1c
            pl.BlockSpec((1, G), lambda bi, ni: (0, 0)),       # b1
            pl.BlockSpec((G, G), lambda bi, ni: (0, 0)),       # w2h1
            pl.BlockSpec((C, G), lambda bi, ni: (0, 0)),       # w2d
            pl.BlockSpec((C, G), lambda bi, ni: (0, 0)),       # w2c
            pl.BlockSpec((1, G), lambda bi, ni: (0, 0)),       # b2
            pl.BlockSpec((G, G), lambda bi, ni: (0, 0)),       # w3h2
            pl.BlockSpec((G, G), lambda bi, ni: (0, 0)),       # w3h1
            pl.BlockSpec((C, G), lambda bi, ni: (0, 0)),       # w3d
            pl.BlockSpec((C, G), lambda bi, ni: (0, 0)),       # w3c
            pl.BlockSpec((1, G), lambda bi, ni: (0, 0)),       # b3
            pl.BlockSpec((Ccat, Cnext), lambda bi, ni: (0, 0)),  # wn
            pl.BlockSpec((1, Cnext), lambda bi, ni: (0, 0)),     # bn
        ],
        out_specs=tuple(out_specs),
        compiler_params=pltpu.CompilerParams(
            dimension_semantics=("parallel", "parallel"),
            vmem_limit_bytes=32 * 1024 * 1024),
        cost_estimate=pl.CostEstimate(flops=flops, transcendentals=0,
                                      bytes_accessed=bytes_acc),
    )(knn_bknc, ctr_bnc, res_bnc,
      w1d, w1c, b1, w2h1, w2d, w2c, b2, w3h2, w3h1, w3d, w3c, b3, wn, bn)
    return outs


# ------------------------------ plain-JAX glue --------------------------------

def knn_indices(x_bnc, k):
    """kNN in feature space (includes the point itself).  x: (B, N, C) -> (B, N, k)."""
    sq = jnp.sum(x_bnc * x_bnc, axis=-1)
    d2 = (sq[:, :, None]
          - 2.0 * jnp.einsum("bnc,bmc->bnm", x_bnc, x_bnc, precision=_PRECISION)
          + sq[:, None, :])
    # TODO(synk): top-k neighbor selection has no Pallas TPU primitive; done in JAX.
    _, idx = lax.top_k(-d2, k)
    return idx


def gather_neighbors(x_bnc, idx):
    """Gather neighbor features as (B, k, N, C); transposed-index gather avoids
    a separate (B,N,k,C)->(B,k,N,C) transpose pass."""
    # TODO(synk): large-table neighbor gather stays in XLA (no clean Pallas gather).
    idx_t = jnp.swapaxes(idx, 1, 2)                          # (B, k, N)
    return jax.vmap(lambda xb, ib: xb[ib])(x_bnc, idx_t)     # (B, k, N, C)


# ------------------------- reference (pure-JAX) compute ------------------------

def _pointwise_ref(x_bnc, w, b, relu):
    h = jnp.einsum("bnc,co->bno", x_bnc, w, precision=_PRECISION) + b
    return jnp.maximum(h, 0.0) if relu else h


def _head_ref(x_bnc, w1, b1, w2, b2):
    h = _pointwise_ref(x_bnc, w1, b1, True)
    return _pointwise_ref(h, w2, b2, False)


def _dense_layer_ref(knn, ctr, res, dc_params, wn, bn, *, emit_cat):
    """Unfused reference for one dense block + residual concat + next 1x1 conv."""
    w1, b1, w2, b2, w3, b3 = dc_params
    B, K, N, C = knn.shape
    center = jnp.broadcast_to(ctr[:, None, :, :], (B, K, N, C))
    # TODO(synk): denseconv.edge_feature_model is undefined in the source (and its
    # result is immediately overwritten); the standard PU-GAN edge feature
    # (center ⊕ neighbor-center) is used so the declared in_channels = 2*C hold.
    y = jnp.concatenate([center, knn - center], axis=-1)

    def conv(t, w, b):
        return jnp.einsum("bknc,co->bkno", t, w, precision=_PRECISION) + b

    h1 = jax.nn.relu(conv(y, w1, b1))
    c1 = jnp.concatenate([h1, y], axis=-1)
    h2 = jax.nn.relu(conv(c1, w2, b2))
    c2 = jnp.concatenate([h2, c1], axis=-1)
    h3 = conv(c2, w3, b3)
    c3 = jnp.concatenate([h3, c2], axis=-1)
    final = jnp.max(c3, axis=1)
    cat = jnp.concatenate([final, res], axis=-1)
    nxt = _pointwise_ref(cat, wn, bn, True)
    return (cat, nxt) if emit_cat else (nxt,)


# ------------------------------ model forward ---------------------------------

def _pw(x, w, b, relu, use_pallas):
    return pointwise_conv(x, w, b, relu=relu) if use_pallas else _pointwise_ref(x, w, b, relu)


def _dense_layer(c_in, res, dc_params, wn, bn, *, use_pallas, emit_cat,
                 idx=None, k=_KNN):
    if idx is None:
        idx = knn_indices(c_in, k)
    knn = gather_neighbors(c_in, idx)
    if use_pallas:
        outs = denseconv_fused(knn, c_in, res, dc_params, wn, bn, emit_cat=emit_cat)
    else:
        outs = _dense_layer_ref(knn, c_in, res, dc_params, wn, bn, emit_cat=emit_cat)
    if emit_cat:
        cat, nxt = outs
        return cat, nxt, idx
    (nxt,) = outs
    return nxt, idx


def generator_recon_forward(x_bcn, p, *, use_pallas=True,
                            knn_idx=(None, None, None, None)):
    """Mirrors Generator_recon.forward: x (B, 3, N) -> coord (B, 3, N).
    (`up_ratio` / `patch_num_point` are unused by the PyTorch forward.)"""
    x = jnp.swapaxes(x_bcn, 1, 2)                                   # (B, N, 3)

    # feature_extraction (each dense layer emits l_i and the next compressed
    # features in one fused kernel call).
    l0 = _pw(x, p["fe_w1"], p["fe_b1"], True, use_pallas)           # (B, N, 24)
    l1, c2, i1 = _dense_layer(l0, l0, p["dc1"], p["fe_w2"], p["fe_b2"],
                              use_pallas=use_pallas, emit_cat=True, idx=knn_idx[0])
    l2, c3, i2 = _dense_layer(c2, l1, p["dc2"], p["fe_w3"], p["fe_b3"],
                              use_pallas=use_pallas, emit_cat=True, idx=knn_idx[1])
    l3, c4, i3 = _dense_layer(c3, l2, p["dc3"], p["fe_w4"], p["fe_b4"],
                              use_pallas=use_pallas, emit_cat=True, idx=knn_idx[2])
    # Last block: the 648-ch concat is only consumed by the head conv0, which is
    # fused in, so the concat itself is never written to HBM.
    h0, i4 = _dense_layer(c4, l3, p["dc4"], p["g_w0"], p["g_b0"],
                          use_pallas=use_pallas, emit_cat=False, idx=knn_idx[3])

    # Generator_recon head tail: 128 -> 64 -> 3.
    if use_pallas:
        coord = head_tail(h0, p["g_w1"], p["g_b1"], p["g_w2"], p["g_b2"])
    else:
        coord = _head_ref(h0, p["g_w1"], p["g_b1"], p["g_w2"], p["g_b2"])
    return jnp.swapaxes(coord, 1, 2), (i1, i2, i3, i4)


# ------------------------------ parameter init --------------------------------

def _conv_init(key, cin, cout):
    """PyTorch Conv default: U(-1/sqrt(fan_in), 1/sqrt(fan_in)); weight stored (Cin, Cout)."""
    kw, kb = jax.random.split(key)
    bound = 1.0 / float(np.sqrt(cin))
    w = jax.random.uniform(kw, (cin, cout), jnp.float32, -bound, bound)
    b = jax.random.uniform(kb, (1, cout), jnp.float32, -bound, bound)
    return w, b


def _denseconv_init(key, in_channels, growth_rate):
    k1, k2, k3 = jax.random.split(key, 3)
    w1, b1 = _conv_init(k1, in_channels, growth_rate)
    w2, b2 = _conv_init(k2, growth_rate + in_channels, growth_rate)
    w3, b3 = _conv_init(k3, 2 * growth_rate + in_channels, growth_rate)
    return (w1, b1, w2, b2, w3, b3)


def init_generator_params(key):
    ks = jax.random.split(key, 11)
    growth, comp = 24, 48
    p = {}
    p["fe_w1"], p["fe_b1"] = _conv_init(ks[0], 3, 24)
    p["dc1"] = _denseconv_init(ks[1], 48, growth)     # in_channels = 24*2
    p["fe_w2"], p["fe_b2"] = _conv_init(ks[2], 144, comp)
    p["dc2"] = _denseconv_init(ks[3], 96, growth)     # in_channels = 48*2
    p["fe_w3"], p["fe_b3"] = _conv_init(ks[4], 312, comp)
    p["dc3"] = _denseconv_init(ks[5], 96, growth)
    p["fe_w4"], p["fe_b4"] = _conv_init(ks[6], 480, comp)
    p["dc4"] = _denseconv_init(ks[7], 96, growth)
    p["g_w0"], p["g_b0"] = _conv_init(ks[8], 648, 128)
    p["g_w1"], p["g_b1"] = _conv_init(ks[9], 128, 64)
    p["g_w2"], p["g_b2"] = _conv_init(ks[10], 64, 3)
    return p


# ----------------------------------- main --------------------------------------

if __name__ == "__main__":
    key = jax.random.PRNGKey(0)
    B, N = 2, 32                     # small demo; k=16 neighbors needs N >= 16

    kx, kp = jax.random.split(key)
    x = jax.random.normal(kx, (B, 3, N), jnp.float32)
    params = init_generator_params(kp)

    coord, idx = generator_recon_forward(x, params, use_pallas=True)
    coord = jax.block_until_ready(coord)
    assert coord.shape == (B, 3, N), coord.shape

    # Reference: same network with plain-JAX einsum compute, reusing the same kNN
    # indices so the comparison isolates the Pallas kernels (the kNN glue is the
    # identical JAX code in both paths).
    ref_coord, _ = generator_recon_forward(x, params, use_pallas=False, knn_idx=idx)
    np.testing.assert_allclose(np.asarray(coord), np.asarray(ref_coord),
                               rtol=1e-3, atol=1e-3)

    print("KERNEL_OK")
</pallas_src>

<mosaic_0001>
module attributes {stable_mosaic.version = 11 : i64} {
  func.func @_pointwise_kernel(%arg0: i32, %arg1: i32, %arg2: memref<1x32x3xf32, #tpu.memory_space<vmem>>, %arg3: memref<3x24xf32, #tpu.memory_space<vmem>>, %arg4: memref<1x24xf32, #tpu.memory_space<vmem>>, %arg5: memref<1x32x24xf32, #tpu.memory_space<vmem>>) attributes {dimension_semantics = [#tpu.dimension_semantics<parallel>, #tpu.dimension_semantics<parallel>], iteration_bounds = array<i64: 2, 1>, scalar_prefetch = 0 : i64, scratch_operands = 0 : i64, tpu.core_type = #tpu.core_type<tc>, window_params = [{transform_indices = @transform_0, window_bounds = array<i64: 1, 32, 3>}, {pipeline_mode = #tpu.pipeline_mode<synchronous>, transform_indices = @transform_1, window_bounds = array<i64: 3, 24>}, {pipeline_mode = #tpu.pipeline_mode<synchronous>, transform_indices = @transform_2, window_bounds = array<i64: 1, 24>}, {transform_indices = @transform_3, window_bounds = array<i64: 1, 32, 24>}]} {
    %c0 = arith.constant 0 : index
    %c0_0 = arith.constant 0 : index
    %c0_1 = arith.constant 0 : index
    %0 = vector.load %arg2[%c0, %c0_0, %c0_1] : memref<1x32x3xf32, #tpu.memory_space<vmem>>, vector<1x32x3xf32>
    %1 = vector.shape_cast %0 : vector<1x32x3xf32> to vector<32x3xf32>
    %c0_2 = arith.constant 0 : index
    %c0_3 = arith.constant 0 : index
    %2 = vector.load %arg3[%c0_2, %c0_3] : memref<3x24xf32, #tpu.memory_space<vmem>>, vector<3x24xf32>
    %cst = arith.constant dense<0.000000e+00> : vector<32x24xf32>
    %3 = tpu.matmul %1, %2, %cst {dimension_numbers = #tpu.dot_dimension_numbers<[1], [0], [0], [1], [0, 0, 1, 1], [], []>, precision = #tpu.contract_precision<fp32>} : vector<32x3xf32>, vector<3x24xf32>, vector<32x24xf32> -> vector<32x24xf32>
    %c0_4 = arith.constant 0 : index
    %c0_5 = arith.constant 0 : index
    %4 = vector.load %arg4[%c0_4, %c0_5] : memref<1x24xf32, #tpu.memory_space<vmem>>, vector<1x24xf32>
    %5 = vector.broadcast %4 : vector<1x24xf32> to vector<32x24xf32>
    %6 = arith.addf %3, %5 : vector<32x24xf32>
    %cst_6 = arith.constant 0.000000e+00 : f32
    %7 = vector.broadcast %cst_6 : f32 to vector<32x24xf32>
    %8 = arith.maximumf %6, %7 : vector<32x24xf32>
    %c0_7 = arith.constant 0 : index
    %c0_8 = arith.constant 0 : index
    %c0_9 = arith.constant 0 : index
    %9 = vector.load %arg5[%c0_7, %c0_8, %c0_9] : memref<1x32x24xf32, #tpu.memory_space<vmem>>, vector<1x32x24xf32>
    %10 = vector.shape_cast %9 : vector<1x32x24xf32> to vector<32x24xf32>
    %11 = vector.shape_cast %8 : vector<32x24xf32> to vector<1x32x24xf32>
    tpu.vector_store %arg5[%c0_7, %c0_8, %c0_9], %11 {strides = array<i32>} : memref<1x32x24xf32, #tpu.memory_space<vmem>>, vector<1x32x24xf32>,
    return
  }
  func.func @transform_0(%arg0: i32, %arg1: i32) -> (i32, i32, i32) {
    %c0_i32 = arith.constant 0 : i32
    %c0_i32_0 = arith.constant 0 : i32
    return %arg0, %arg1, %c0_i32 : i32, i32, i32
  }
  func.func @transform_1(%arg0: i32, %arg1: i32) -> (i32, i32) {
    %c0_i32 = arith.constant 0 : i32
    %c0_i32_0 = arith.constant 0 : i32
    %c0_i32_1 = arith.constant 0 : i32
    return %c0_i32, %c0_i32_0 : i32, i32
  }
  func.func @transform_2(%arg0: i32, %arg1: i32) -> (i32, i32) {
    %c0_i32 = arith.constant 0 : i32
    %c0_i32_0 = arith.constant 0 : i32
    %c0_i32_1 = arith.constant 0 : i32
    return %c0_i32, %c0_i32_0 : i32, i32
  }
  func.func @transform_3(%arg0: i32, %arg1: i32) -> (i32, i32, i32) {
    %c0_i32 = arith.constant 0 : i32
    %c0_i32_0 = arith.constant 0 : i32
    return %arg0, %arg1, %c0_i32 : i32, i32, i32
  }
}

</mosaic_0001>

<llo_original>
// kernel: tpu_custom_call.1
$region0: #{tpu_custom_call.1}
  #allocation0 [shape = 'u32[]', space=smem, size = 0x4, offset = 0x4, fixed_abs, tag = 'smem constant byte address 0x4 - core index']
  #allocation1 [shape = 'u32[72,128]{1,0:T(1,128)}', space=vmem, size = 0x9000, scoped, tag = 'internal scratch']
  %s0 = inlined_call_operand.vmem [shape: f32[2,32,3], index: 0, kind: input, shape index: {}]
  %s1 = inlined_call_operand.vmem [shape: f32[3,24], index: 1, kind: input, shape index: {}]
  %s2 = inlined_call_operand.vmem [shape: f32[1,24], index: 2, kind: input, shape index: {}]
  %s3 = inlined_call_operand.vmem [shape: f32[2,32,24], index: 3, kind: output, shape index: {}]
  %s4 = sld [smem:[#allocation0]]
  $region45: #{tpu_custom_call.1} parent=0
    _
  %s6 = ssub.s32 1, %s4
  %s7 = scalar_select 0, %s6, %s4
  loop: start=0, step=1, limit=4
  $region2: #{tpu_custom_call.1} parent=0 // loop_pre_header
    _
  $region3: #{tpu_custom_call.1} parent=0 // loop_header
    %s9 = sphi 0, %s13
    %p10 = scmp.ge.s32.totalorder %s9, 4
    %s16 = sphi 0, %s28
    %s17 = sphi 0, %s24
    %s18 = sphi 0, %s16
    %s19 = sphi 0, %s17
    %s20 = sphi 0, %s18
    %s21 = sphi 0, %s19
    %s33 = sphi 0, %s35
    %s36 = sphi 0, %s33
    %s37 = sphi 0, %s36
    %s53 = sphi 0, %s37
    %s57 = sphi 0, %s57
    %s59 = sphi 0, %s57
    %s60 = sphi 0, %s59
    %s74 = sphi 0, %s60
    %s78 = sphi 0, %s78
    %s80 = sphi 0, %s78
    %s81 = sphi 0, %s80
    %s95 = sphi 0, %s81
    %s103 = sphi 0, %s105
    %s106 = sphi 0, %s103
    %s107 = sphi 0, %s106
    %s123 = sphi 0, %s107
  $region4: #{tpu_custom_call.1} parent=0 // loop_header_branch
    %12 = sbr.rel (%p10) target = $region8
  $region5: #{tpu_custom_call.1} parent=0 // loop_body
    %s14 = ssub.s32 %s9, 1
    %s15 = ssub.s32 %s9, 2
    %s22 = sadd.s32 1, %s17
    %p23 = scmp.ge.s32.totalorder %s22, 1
    %s24 = scalar_select %p23, 0, %s22
    %s25 = sadd.s32 1, %s16
    %s26 = scalar_select %p23, %s25, %s16
    %p27 = scmp.ge.s32.totalorder %s26, 2
    %s28 = scalar_select %p27, 0, %s26
    %s29 = ssub.s32 %s16, %s28
    %s30 = ssub.s32 %s17, %s24
    %s31 = sor.u32 %s29, %s30
    %p32 = scmp.eq.s32.totalorder %s31, 0
    %s34 = sadd.s32 %s33, 1
    %s35 = scalar_select %p32, %s33, %s34
    %p38 = pneg %p32
    %p39 = scmp.eq.s32.totalorder %s9, 1
    %p40 = por %p38, %p39
    %p41 = scmp.ne.s32.totalorder %s33, %s36
    %p42 = scmp.eq.s32.totalorder %s9, 0
    %p43 = por %p41, %p42
    %p44 = scmp.ne.s32.totalorder %s33, %s36
    %p45 = scmp.eq.s32.totalorder %s14, 1
    %p46 = por %p44, %p45
    %p47 = scmp.ne.s32.totalorder %s36, %s37
    %p48 = scmp.eq.s32.totalorder %s14, 0
    %p49 = por %p47, %p48
    %p50 = scmp.ne.s32.totalorder %s36, %s37
    %p51 = scmp.eq.s32.totalorder %s15, 1
    %p52 = por %p50, %p51
    %p54 = scmp.ne.s32.totalorder %s37, %s53
    %p55 = scmp.eq.s32.totalorder %s15, 0
    %p56 = por %p54, %p55
    %s58 = sadd.s32 %s57, 1
    %p61 = scmp.eq.s32.totalorder %s9, 1
    %p62 = scmp.ne.s32.totalorder %s57, %s59
    %p63 = scmp.eq.s32.totalorder %s9, 0
    %p64 = por %p62, %p63
    %p65 = scmp.ne.s32.totalorder %s57, %s59
    %p66 = scmp.eq.s32.totalorder %s14, 1
    %p67 = por %p65, %p66
    %p68 = scmp.ne.s32.totalorder %s59, %s60
    %p69 = scmp.eq.s32.totalorder %s14, 0
    %p70 = por %p68, %p69
    %p71 = scmp.ne.s32.totalorder %s59, %s60
    %p72 = scmp.eq.s32.totalorder %s15, 1
    %p73 = por %p71, %p72
    %p75 = scmp.ne.s32.totalorder %s60, %s74
    %p76 = scmp.eq.s32.totalorder %s15, 0
    %p77 = por %p75, %p76
    %s79 = sadd.s32 %s78, 1
    %p82 = scmp.eq.s32.totalorder %s9, 1
    %p83 = scmp.ne.s32.totalorder %s78, %s80
    %p84 = scmp.eq.s32.totalorder %s9, 0
    %p85 = por %p83, %p84
    %p86 = scmp.ne.s32.totalorder %s78, %s80
    %p87 = scmp.eq.s32.totalorder %s14, 1
    %p88 = por %p86, %p87
    %p89 = scmp.ne.s32.totalorder %s80, %s81
    %p90 = scmp.eq.s32.totalorder %s14, 0
    %p91 = por %p89, %p90
    %p92 = scmp.ne.s32.totalorder %s80, %s81
    %p93 = scmp.eq.s32.totalorder %s15, 1
    %p94 = por %p92, %p93
    %p96 = scmp.ne.s32.totalorder %s81, %s95
    %p97 = scmp.eq.s32.totalorder %s15, 0
    %p98 = por %p96, %p97
    %s99 = ssub.s32 %s16, %s28
    %s100 = ssub.s32 %s17, %s24
    %s101 = sor.u32 %s99, %s100
    %p102 = scmp.eq.s32.totalorder %s101, 0
    %s104 = sadd.s32 %s103, 1
    %s105 = scalar_select %p102, %s103, %s104
    %p108 = pneg %p102
    %p109 = scmp.eq.s32.totalorder %s9, 1
    %p110 = por %p108, %p109
    %p111 = scmp.ne.s32.totalorder %s103, %s106
    %p112 = scmp.eq.s32.totalorder %s9, 0
    %p113 = por %p111, %p112
    %p114 = scmp.ne.s32.totalorder %s103, %s106
    %p115 = scmp.eq.s32.totalorder %s14, 1
    %p116 = por %p114, %p115
    %p117 = scmp.ne.s32.totalorder %s106, %s107
    %p118 = scmp.eq.s32.totalorder %s14, 0
    %p119 = por %p117, %p118
    %p120 = scmp.ne.s32.totalorder %s106, %s107
    %p121 = scmp.eq.s32.totalorder %s15, 1
    %p122 = por %p120, %p121
    %p124 = scmp.ne.s32.totalorder %s107, %s123
    %p125 = scmp.eq.s32.totalorder %s15, 0
    %p126 = por %p124, %p125
    %p127 = scmp.le.s32.totalorder 1, %s9
    %p128 = scmp.lt.s32.totalorder %s9, 3
    %p129 = pnand %p127, %p128
    %p130 = pneg %p129
    // Predicated region
    $region9: #{tpu_custom_call.1} parent=5 // pred_check
      _
    $region10: #{tpu_custom_call.1} parent=5 // pred_check_branch
      %132 = sbr.rel (%p129) target = $region12
    $region11: #{tpu_custom_call.1} parent=5 // pred_region
      %s133 = ssub.s32 %s9, 1
      // Predicated region
      $region13: #{tpu_custom_call.1} parent=11 // pred_check
        %p134 = pneg %p70
      $region14: #{tpu_custom_call.1} parent=11 // pred_check_branch
        %136 = sbr.rel (%p134) target = $region16
      $region15: #{tpu_custom_call.1} parent=11 // pred_region
        _
      $region16: #{tpu_custom_call.1} parent=11 // pred_fallthru
        _
      // Predicated region
      $region17: #{tpu_custom_call.1} parent=11 // pred_check
        %p137 = pneg %p91
      $region18: #{tpu_custom_call.1} parent=11 // pred_check_branch
        %139 = sbr.rel (%p137) target = $region20
      $region19: #{tpu_custom_call.1} parent=11 // pred_region
        _
      $region20: #{tpu_custom_call.1} parent=11 // pred_fallthru
        _
    $region12: #{tpu_custom_call.1} parent=5 // pred_fallthru
      _
    %p140 = scmp.lt.s32.totalorder %s9, 2
    // Predicated region
    $region21: #{tpu_custom_call.1} parent=5 // pred_check
      %p141 = pneg %p140
    $region22: #{tpu_custom_call.1} parent=5 // pred_check_branch
      %143 = sbr.rel (%p141) target = $region24
    $region23: #{tpu_custom_call.1} parent=5 // pred_region
      // Predicated region
      $region25: #{tpu_custom_call.1} parent=23 // pred_check
        %p144 = pneg %p43
      $region26: #{tpu_custom_call.1} parent=23 // pred_check_branch
        %146 = sbr.rel (%p144) target = $region28
      $region27: #{tpu_custom_call.1} parent=23 // pred_region
        %s147 = smul.u32 4, %s17
        %p148 = scmp.lt.s32.totalorder %s16, 1
        %s149 = scalar_select %p148, %s16, 1
        %p150 = scmp.lt.s32.totalorder %s147, 3
        %s151 = scalar_select %p150, %s147, 3
        %s152 = smul.addr %s149, 4
        %s153 = sadd.s32 %s151, %s152
        %s154 = smul.addr %s153, 8
        %s155 = scalar_lea.vmem %s0, %s154
        %s156 = smul.u32 4, %s17
      $region28: #{tpu_custom_call.1} parent=23 // pred_fallthru
        _
    $region24: #{tpu_custom_call.1} parent=5 // pred_fallthru
      _
    %p157 = scmp.le.s32.totalorder 1, %s9
    %p158 = scmp.lt.s32.totalorder %s9, 3
    %p159 = pnand %p157, %p158
    %p160 = pneg %p159
    // Predicated region
    $region29: #{tpu_custom_call.1} parent=5 // pred_check
      _
    $region30: #{tpu_custom_call.1} parent=5 // pred_check_branch
      %162 = sbr.rel (%p159) target = $region32
    $region31: #{tpu_custom_call.1} parent=5 // pred_region
      %s163 = ssub.s32 %s9, 1
      %s164 = smul.u32 4, %s19
      %p165 = scmp.lt.s32.totalorder %s18, 1
      %s166 = scalar_select %p165, %s18, 1
      %p167 = scmp.lt.s32.totalorder %s164, 3
      %s168 = scalar_select %p167, %s164, 3
      %s169 = smul.addr %s166, 4
      %s170 = sadd.s32 %s168, %s169
      %s171 = smul.addr %s170, 8
      %s172 = scalar_lea.vmem %s0, %s171
      %p173 = pneg %p49
      %p174 = pneg %p46
      %p175 = pneg %p70
      %p176 = pneg %p67
      %p177 = pneg %p91
      %p178 = pneg %p88
      %p179 = pneg %p119
      %p180 = pneg %p116
      %s181 = smul.u32 4, %s19
      %p182 = scmp.lt.s32.totalorder %s18, 1
      %s183 = scalar_select %p182, %s18, 1
      %p184 = scmp.lt.s32.totalorder %s181, 3
      %s185 = scalar_select %p184, %s181, 3
      %s186 = smul.addr %s183, 4
      %s187 = sadd.s32 %s185, %s186
      %s188 = smul.addr %s187, 8
      %s189 = scalar_lea.vmem %s3, %s188
      %s190 = smul.u32 4, %s19
      %p191 = scmp.lt.s32.totalorder %s18, 1
      %s192 = scalar_select %p191, %s18, 1
      %p193 = scmp.lt.s32.totalorder %s190, 3
      %s194 = scalar_select %p193, %s190, 3
      %s195 = smul.addr %s192, 4
      %s196 = sadd.s32 %s194, %s195
      %s197 = smul.addr %s196, 8
      %s198 = scalar_lea.vmem %s0, %s197
      %s199 = smul.u32 4, %s19
      %s200 = smul.u32 4, %s19
      %p201 = scmp.lt.s32.totalorder %s18, 1
      %s202 = scalar_select %p201, %s18, 1
      %p203 = scmp.lt.s32.totalorder %s200, 3
      %s204 = scalar_select %p203, %s200, 3
      %s205 = smul.addr %s202, 4
      %s206 = sadd.s32 %s204, %s205
      %s207 = smul.addr %s206, 8
      %s208 = scalar_lea.vmem %s3, %s207
      %s209 = smul.u32 4, %s19
      %v210 = vld [vmem:[%s198] sm:$0xff]
      %v211 = vld [vmem:[%s198 + $0x8] sm:$0xff]
      %v212 = vld [vmem:[%s198 + $0x10] sm:$0xff]
      %v213 = vld [vmem:[%s198 + $0x18] sm:$0xff]
      %v214 = vld [vmem:[%s1] sm:$0x7]
      %v215 = vld [vmem:[%s2] sm:$0x1]
      %v217 = vperm.slane %v215, 0
      %vm219 = vcmask 23552
      %v221 = vsel %vm219, %v210, 0
      %v224 = vsel %vm219, %v211, 0
      %v227 = vsel %vm219, %v212, 0
      %v230 = vsel %vm219, %v213, 0
      %vm232 = vcmask 1042432
      %v234 = vsel %vm232, %v214, 0
      %236 = vmatpush.msra.mxu0 0.0
      %237 = vmatpush.msra.mxu0 0.0
      %238 = vmatpush.msra.mxu0 0.0
      %239 = vmatpush.msra.mxu0 0.0
      %240 = vmatpush.msra.mxu0 0.0
      %241 = vmatpush.msra.mxu0 0.0
      %242 = vmatpush.msra.mxu0 0.0
      %243 = vmatpush.msra.mxu0 0.0
      %244 = vmatpush.msra.mxu0 0.0
      %245 = vmatpush.msra.mxu0 0.0
      %246 = vmatpush.msra.mxu0 0.0
      %247 = vmatpush.msra.mxu0 0.0
      %248 = vmatpush.msra.mxu0 0.0
      %249 = vmatpush.msra.mxu0 0.0
      %250 = vmatpush.msra.mxu0 0.0
      %v251 = vand.u32 %v234, 4294901760
      %252 = vmatpush.msra.mxu0 %v251
      %v253 = vand.u32 %v221, 4294901760
      %v254 = vsub.f32 %v221, %v253
      %v255 = vand.u32 %v254, 4294901760
      %v256 = vsub.f32 %v254, %v255
      %v257 = vand.u32 %v256, 4294901760
      %258 = vmatmul.f32.gmra.mxu0 %v257
      %v259 = vpop.f32.mrf.mxu0
      %v260 = vadd.f32 %v217, %v259
      %v261 = vand.u32 %v224, 4294901760
      %v262 = vsub.f32 %v224, %v261
      %v263 = vand.u32 %v262, 4294901760
      %v264 = vsub.f32 %v262, %v263
      %v265 = vand.u32 %v264, 4294901760
      %266 = vmatmul.f32.gmra.mxu0 %v265
      %v267 = vpop.f32.mrf.mxu0
      %v268 = vadd.f32 %v217, %v267
      %v269 = vand.u32 %v227, 4294901760
      %v270 = vsub.f32 %v227, %v269
      %v271 = vand.u32 %v270, 4294901760
      %v272 = vsub.f32 %v270, %v271
      %v273 = vand.u32 %v272, 4294901760
      %274 = vmatmul.f32.gmra.mxu0 %v273
      %v275 = vpop.f32.mrf.mxu0
      %v276 = vadd.f32 %v217, %v275
      %v277 = vand.u32 %v230, 4294901760
      %v278 = vsub.f32 %v230, %v277
      %v279 = vand.u32 %v278, 4294901760
      %v280 = vsub.f32 %v278, %v279
      %v281 = vand.u32 %v280, 4294901760
      %282 = vmatmul.f32.gmra.mxu0 %v281
      %v283 = vpop.f32.mrf.mxu0
      %v284 = vadd.f32 %v217, %v283
      %285 = vdwg.mxu0
      %286 = vmatpush.msra.mxu0 0.0
      %287 = vmatpush.msra.mxu0 0.0
      %288 = vmatpush.msra.mxu0 0.0
      %289 = vmatpush.msra.mxu0 0.0
      %290 = vmatpush.msra.mxu0 0.0
      %291 = vmatpush.msra.mxu0 0.0
      %292 = vmatpush.msra.mxu0 0.0
      %293 = vmatpush.msra.mxu0 0.0
      %294 = vmatpush.msra.mxu0 0.0
      %295 = vmatpush.msra.mxu0 0.0
      %296 = vmatpush.msra.mxu0 0.0
      %297 = vmatpush.msra.mxu0 0.0
      %298 = vmatpush.msra.mxu0 0.0
      %299 = vmatpush.msra.mxu0 0.0
      %300 = vmatpush.msra.mxu0 0.0
      %v301 = vand.u32 %v234, 4294901760
      %v302 = vsub.f32 %v234, %v301
      %v303 = vand.u32 %v302, 4294901760
      %v304 = vsub.f32 %v302, %v303
      %v305 = vand.u32 %v304, 4294901760
      %306 = vmatpush.msra.mxu0 %v305
      %v307 = vand.u32 %v221, 4294901760
      %308 = vmatmul.f32.gmra.mxu0 %v307
      %v309 = vpop.f32.mrf.mxu0
      %v310 = vadd.f32 %v260, %v309
      %v311 = vand.u32 %v224, 4294901760
      %312 = vmatmul.f32.gmra.mxu0 %v311
      %v313 = vpop.f32.mrf.mxu0
      %v314 = vadd.f32 %v268, %v313
      %v315 = vand.u32 %v227, 4294901760
      %316 = vmatmul.f32.gmra.mxu0 %v315
      %v317 = vpop.f32.mrf.mxu0
      %v318 = vadd.f32 %v276, %v317
      %v319 = vand.u32 %v230, 4294901760
      %320 = vmatmul.f32.gmra.mxu0 %v319
      %v321 = vpop.f32.mrf.mxu0
      %v322 = vadd.f32 %v284, %v321
      %323 = vdwg.mxu0
      %324 = vmatpush.msra.mxu0 0.0
      %325 = vmatpush.msra.mxu0 0.0
      %326 = vmatpush.msra.mxu0 0.0
      %327 = vmatpush.msra.mxu0 0.0
      %328 = vmatpush.msra.mxu0 0.0
      %329 = vmatpush.msra.mxu0 0.0
      %330 = vmatpush.msra.mxu0 0.0
      %331 = vmatpush.msra.mxu0 0.0
      %332 = vmatpush.msra.mxu0 0.0
      %333 = vmatpush.msra.mxu0 0.0
      %334 = vmatpush.msra.mxu0 0.0
      %335 = vmatpush.msra.mxu0 0.0
      %336 = vmatpush.msra.mxu0 0.0
      %337 = vmatpush.msra.mxu0 0.0
      %338 = vmatpush.msra.mxu0 0.0
      %v339 = vand.u32 %v234, 4294901760
      %v340 = vsub.f32 %v234, %v339
      %341 = vmatpush.msra.mxu0 %v340
      %v342 = vand.u32 %v221, 4294901760
      %v343 = vsub.f32 %v221, %v342
      %344 = vmatmul.f32.gmra.mxu0 %v343
      %v345 = vpop.f32.mrf.mxu0
      %v346 = vadd.f32 %v310, %v345
      %v347 = vand.u32 %v224, 4294901760
      %v348 = vsub.f32 %v224, %v347
      %349 = vmatmul.f32.gmra.mxu0 %v348
      %v350 = vpop.f32.mrf.mxu0
      %v351 = vadd.f32 %v314, %v350
      %v352 = vand.u32 %v227, 4294901760
      %v353 = vsub.f32 %v227, %v352
      %354 = vmatmul.f32.gmra.mxu0 %v353
      %v355 = vpop.f32.mrf.mxu0
      %v356 = vadd.f32 %v318, %v355
      %v357 = vand.u32 %v230, 4294901760
      %v358 = vsub.f32 %v230, %v357
      %359 = vmatmul.f32.gmra.mxu0 %v358
      %v360 = vpop.f32.mrf.mxu0
      %v361 = vadd.f32 %v322, %v360
      %362 = vdwg.mxu0
      %363 = vmatpush.msra.mxu0 0.0
      %364 = vmatpush.msra.mxu0 0.0
      %365 = vmatpush.msra.mxu0 0.0
      %366 = vmatpush.msra.mxu0 0.0
      %367 = vmatpush.msra.mxu0 0.0
      %368 = vmatpush.msra.mxu0 0.0
      %369 = vmatpush.msra.mxu0 0.0
      %370 = vmatpush.msra.mxu0 0.0
      %371 = vmatpush.msra.mxu0 0.0
      %372 = vmatpush.msra.mxu0 0.0
      %373 = vmatpush.msra.mxu0 0.0
      %374 = vmatpush.msra.mxu0 0.0
      %375 = vmatpush.msra.mxu0 0.0
      %376 = vmatpush.msra.mxu0 0.0
      %377 = vmatpush.msra.mxu0 0.0
      %v378 = vand.u32 %v234, 4294901760
      %379 = vmatpush.msra.mxu0 %v378
      %v380 = vand.u32 %v221, 4294901760
      %v381 = vsub.f32 %v221, %v380
      %v382 = vand.u32 %v381, 4294901760
      %383 = vmatmul.f32.gmra.mxu0 %v382
      %v384 = vpop.f32.mrf.mxu0
      %v385 = vadd.f32 %v346, %v384
      %v386 = vand.u32 %v224, 4294901760
      %v387 = vsub.f32 %v224, %v386
      %v388 = vand.u32 %v387, 4294901760
      %389 = vmatmul.f32.gmra.mxu0 %v388
      %v390 = vpop.f32.mrf.mxu0
      %v391 = vadd.f32 %v351, %v390
      %v392 = vand.u32 %v227, 4294901760
      %v393 = vsub.f32 %v227, %v392
      %v394 = vand.u32 %v393, 4294901760
      %395 = vmatmul.f32.gmra.mxu0 %v394
      %v396 = vpop.f32.mrf.mxu0
      %v397 = vadd.f32 %v356, %v396
      %v398 = vand.u32 %v230, 4294901760
      %v399 = vsub.f32 %v230, %v398
      %v400 = vand.u32 %v399, 4294901760
      %401 = vmatmul.f32.gmra.mxu0 %v400
      %v402 = vpop.f32.mrf.mxu0
      %v403 = vadd.f32 %v361, %v402
      %404 = vdwg.mxu0
      %405 = vmatpush.msra.mxu0 0.0
      %406 = vmatpush.msra.mxu0 0.0
      %407 = vmatpush.msra.mxu0 0.0
      %408 = vmatpush.msra.mxu0 0.0
      %409 = vmatpush.msra.mxu0 0.0
      %410 = vmatpush.msra.mxu0 0.0
      %411 = vmatpush.msra.mxu0 0.0
      %412 = vmatpush.msra.mxu0 0.0
      %413 = vmatpush.msra.mxu0 0.0
      %414 = vmatpush.msra.mxu0 0.0
      %415 = vmatpush.msra.mxu0 0.0
      %416 = vmatpush.msra.mxu0 0.0
      %417 = vmatpush.msra.mxu0 0.0
      %418 = vmatpush.msra.mxu0 0.0
      %419 = vmatpush.msra.mxu0 0.0
      %v420 = vand.u32 %v234, 4294901760
      %v421 = vsub.f32 %v234, %v420
      %v422 = vand.u32 %v421, 4294901760
      %423 = vmatpush.msra.mxu0 %v422
      %v424 = vand.u32 %v221, 4294901760
      %425 = vmatmul.f32.gmra.mxu0 %v424
      %v426 = vpop.f32.mrf.mxu0
      %v427 = vadd.f32 %v385, %v426
      %v428 = vand.u32 %v224, 4294901760
      %429 = vmatmul.f32.gmra.mxu0 %v428
      %v430 = vpop.f32.mrf.mxu0
      %v431 = vadd.f32 %v391, %v430
      %v432 = vand.u32 %v227, 4294901760
      %433 = vmatmul.f32.gmra.mxu0 %v432
      %v434 = vpop.f32.mrf.mxu0
      %v435 = vadd.f32 %v397, %v434
      %v436 = vand.u32 %v230, 4294901760
      %437 = vmatmul.f32.gmra.mxu0 %v436
      %v438 = vpop.f32.mrf.mxu0
      %v439 = vadd.f32 %v403, %v438
      %440 = vdwg.mxu0
      %441 = vmatpush.msra.mxu0 0.0
      %442 = vmatpush.msra.mxu0 0.0
      %443 = vmatpush.msra.mxu0 0.0
      %444 = vmatpush.msra.mxu0 0.0
      %445 = vmatpush.msra.mxu0 0.0
      %446 = vmatpush.msra.mxu0 0.0
      %447 = vmatpush.msra.mxu0 0.0
      %448 = vmatpush.msra.mxu0 0.0
      %449 = vmatpush.msra.mxu0 0.0
      %450 = vmatpush.msra.mxu0 0.0
      %451 = vmatpush.msra.mxu0 0.0
      %452 = vmatpush.msra.mxu0 0.0
      %453 = vmatpush.msra.mxu0 0.0
      %454 = vmatpush.msra.mxu0 0.0
      %455 = vmatpush.msra.mxu0 0.0
      %v456 = vand.u32 %v234, 4294901760
      %457 = vmatpush.msra.mxu0 %v456
      %v458 = vand.u32 %v221, 4294901760
      %459 = vmatmul.f32.gmra.mxu0 %v458
      %v460 = vpop.f32.mrf.mxu0
      %v461 = vadd.f32 %v427, %v460
      %v462 = vand.u32 %v224, 4294901760
      %463 = vmatmul.f32.gmra.mxu0 %v462
      %v464 = vpop.f32.mrf.mxu0
      %v465 = vadd.f32 %v431, %v464
      %v466 = vand.u32 %v227, 4294901760
      %467 = vmatmul.f32.gmra.mxu0 %v466
      %v468 = vpop.f32.mrf.mxu0
      %v469 = vadd.f32 %v435, %v468
      %v470 = vand.u32 %v230, 4294901760
      %471 = vmatmul.f32.gmra.mxu0 %v470
      %v472 = vpop.f32.mrf.mxu0
      %v473 = vadd.f32 %v439, %v472
      %474 = vdwg.mxu0
      %v475 = vmax.f32 %v461, 0.0
      %v476 = vmax.f32 %v465, 0.0
      %v477 = vmax.f32 %v469, 0.0
      %v478 = vmax.f32 %v473, 0.0
      %vm479 = vcmask 195584
      %480 = vst.msk [vmem:[%s208] sm:$0xff] %vm479, %v475
      %481 = vst.msk [vmem:[%s208 + $0x8] sm:$0xff] %vm479, %v476
      %482 = vst.msk [vmem:[%s208 + $0x10] sm:$0xff] %vm479, %v477
      %483 = vst.msk [vmem:[%s208 + $0x18] sm:$0xff] %vm479, %v478
      %s484 = smul.u32 4, %s19
      %p485 = scmp.lt.s32.totalorder %s18, 1
      %s486 = scalar_select %p485, %s18, 1
      %p487 = scmp.lt.s32.totalorder %s484, 3
      %s488 = scalar_select %p487, %s484, 3
      %s489 = smul.addr %s486, 4
      %s490 = sadd.s32 %s488, %s489
      %s491 = smul.addr %s490, 8
      %s492 = scalar_lea.vmem %s3, %s491
      // Predicated region
      $region33: #{tpu_custom_call.1} parent=31 // pred_check
        %p493 = pneg %p116
      $region34: #{tpu_custom_call.1} parent=31 // pred_check_branch
        %495 = sbr.rel (%p493) target = $region36
      $region35: #{tpu_custom_call.1} parent=31 // pred_region
        %s496 = smul.u32 4, %s19
      $region36: #{tpu_custom_call.1} parent=31 // pred_fallthru
        _
    $region32: #{tpu_custom_call.1} parent=5 // pred_fallthru
      _
    %p497 = scmp.le.s32.totalorder 2, %s9
    // Predicated region
    $region37: #{tpu_custom_call.1} parent=5 // pred_check
      %p498 = pneg %p497
    $region38: #{tpu_custom_call.1} parent=5 // pred_check_branch
      %500 = sbr.rel (%p498) target = $region40
    $region39: #{tpu_custom_call.1} parent=5 // pred_region
      %s501 = ssub.s32 %s9, 2
      // Predicated region
      $region41: #{tpu_custom_call.1} parent=39 // pred_check
        %p502 = pneg %p122
      $region42: #{tpu_custom_call.1} parent=39 // pred_check_branch
        %504 = sbr.rel (%p502) target = $region44
      $region43: #{tpu_custom_call.1} parent=39 // pred_region
        %s505 = smul.u32 4, %s21
        %p506 = scmp.lt.s32.totalorder %s20, 1
        %s507 = scalar_select %p506, %s20, 1
        %p508 = scmp.lt.s32.totalorder %s505, 3
        %s509 = scalar_select %p508, %s505, 3
        %s510 = smul.addr %s507, 4
        %s511 = sadd.s32 %s509, %s510
        %s512 = smul.addr %s511, 8
        %s513 = scalar_lea.vmem %s3, %s512
      $region44: #{tpu_custom_call.1} parent=39 // pred_fallthru
        _
    $region40: #{tpu_custom_call.1} parent=5 // pred_fallthru
      _
  $region6: #{tpu_custom_call.1} parent=0 // loop_footer
    %s13 = sadd.s32 1, %s9
  $region7: #{tpu_custom_call.1} parent=0 // loop_footer_branch
    %8 = sbr.rel target = $region3
  $region8: #{tpu_custom_call.1} parent=0 // loop_exit
    _

</llo_original>
